<compile_context>
chip_gen: v6e
topology: v6e:2x2x1
jax: 0.10.0
libtpu: 0.0.40
codegen_flags: <defaults>
</compile_context>

<pallas_src>
import math

import jax
import jax.numpy as jnp
from jax.experimental import pallas as pl
from jax.experimental.pallas import tpu as pltpu

EPS = 1e-12  # matches torch.nn.functional.normalize default eps


# ----------------------------------------------------------------------------
# Generation-aware VMEM budgeting / small helpers
# ----------------------------------------------------------------------------
def _vmem_budget_bytes():
    """Byte budget for the pipelined user buffers of one pallas_call.

    v5e/v6e have 128 MiB physical VMEM per TensorCore, v7x only 64 MiB (and
    2 TCs/chip); cap // 4 leaves headroom for Mosaic internal scratch, the
    resident (non-streamed) operands and the other TensorCore.
    """
    try:
        cap = pltpu.get_tpu_info().vmem_capacity_bytes
    except Exception:
        cap = 64 * 1024 * 1024  # conservative: v7x per-TC physical VMEM
    return int(min(28 * 1024 * 1024, max(8 * 1024 * 1024, cap // 4)))


def _compiler_params(budget):
    # Explicit vmem_limit_bytes sized to our buffers (+8 MiB headroom) so the
    # generation-specific scoped default (16 MiB on v5e) is not a silent cap.
    return pltpu.CompilerParams(
        dimension_semantics=("parallel",),
        vmem_limit_bytes=int(budget + 8 * 1024 * 1024),
    )


def _sublane_multiple(dtype):
    # Rows per packed sublane group: f32 -> 8, bf16 -> 16, int8/fp8 -> 32.
    return max(8, 32 // max(1, jnp.dtype(dtype).itemsize))


def _stream_spec(block_shape, index_map, *, triple=False):
    """BlockSpec for a streamed input; requests 3-deep pipelining when the grid
    is long enough to benefit (hides per-step DMA issue latency, mainly v7x)."""
    if triple:
        try:
            return pl.BlockSpec(block_shape, index_map,
                                pipeline_mode=pl.Buffered(3))
        except (TypeError, AttributeError):
            pass  # older jax without pipeline_mode/Buffered: default 2 buffers
    return pl.BlockSpec(block_shape, index_map)


# ----------------------------------------------------------------------------
# Standalone L2Norm kernel: y = x / max(||x||_2, eps) along the last axis.
# ----------------------------------------------------------------------------
def _l2norm_kernel(x_ref, o_ref):
    # x_ref/o_ref: (tile_rows, D) block in VMEM; D is the lane (fast) axis.
    x = x_ref[...]
    xf = x.astype(jnp.float32)
    sq = jnp.sum(xf * xf, axis=-1, keepdims=True)        # (tile_rows, 1) f32
    # 1 / max(sqrt(sq), EPS) == rsqrt(max(sq, EPS^2))  (sqrt is monotone)
    inv = jax.lax.rsqrt(jnp.maximum(sq, EPS * EPS))
    # Final scale in the input dtype: avoids a second full f32 tile for bf16.
    o_ref[...] = (x * inv.astype(x.dtype)).astype(o_ref.dtype)


def _l2norm_jnp(x):
    xf = x.astype(jnp.float32)
    sq = jnp.sum(xf * xf, axis=-1, keepdims=True)
    inv = jax.lax.rsqrt(jnp.maximum(sq, EPS * EPS))
    return (xf * inv).astype(x.dtype)


def l2_normalize(x, *, tile_rows=None):
    """L2-normalize along the last axis, same semantics as F.normalize(x, 2, -1)."""
    orig_shape = x.shape
    D = orig_shape[-1]
    rows = math.prod(orig_shape[:-1])
    if rows == 0 or D == 0:
        return x

    # Narrow last dims lower to masked partial stores at poor lane utilization;
    # let XLA fuse those instead of paying Pallas per-step overhead.
    if D < 128:
        return _l2norm_jnp(x)

    x2d = x.reshape(rows, D)
    itemsize = jnp.dtype(x.dtype).itemsize
    budget = _vmem_budget_bytes()

    # Live pipelined buffers: up to 3 input (triple-buffered stream) + 2 output.
    max_tr = max(8, budget // (5 * D * itemsize))
    tr = min(rows, max_tr) if tile_rows is None else min(int(tile_rows), rows, max_tr)
    sub = _sublane_multiple(x.dtype)
    if tr < rows:
        tr = max(sub, (tr // sub) * sub)   # packed-sublane-aligned block rows
    else:
        tr = rows                          # single full-extent block
    grid = pl.cdiv(rows, tr)               # ragged last block: writes are masked

    out = pl.pallas_call(
        _l2norm_kernel,
        out_shape=jax.ShapeDtypeStruct((rows, D), x.dtype),
        grid_spec=pltpu.PrefetchScalarGridSpec(
            num_scalar_prefetch=0,
            grid=(grid,),
            in_specs=[_stream_spec((tr, D), lambda i: (i, 0), triple=grid > 2)],
            out_specs=pl.BlockSpec((tr, D), lambda i: (i, 0)),
        ),
        compiler_params=_compiler_params(budget),
        cost_estimate=pl.CostEstimate(
            flops=3 * rows * D,
            transcendentals=rows,
            bytes_accessed=2 * rows * D * itemsize,
        ),
    )(x2d)

    return out.reshape(orig_shape)


# ----------------------------------------------------------------------------
# Fused head kernel: out = L2Norm(feats @ W^T + b) along the 128-wide last dim.
# ----------------------------------------------------------------------------
def _head_kernel(x_ref, w_ref, b_ref, o_ref):
    # x_ref: (tile_b, K) compute dtype   w_ref: (K, N) compute dtype
    # b_ref: (1, N) f32                  o_ref: (tile_b, N)
    y = jnp.dot(x_ref[...], w_ref[...], preferred_element_type=jnp.float32)
    y = y + b_ref[...]
    sq = jnp.sum(y * y, axis=-1, keepdims=True)
    inv = jax.lax.rsqrt(jnp.maximum(sq, EPS * EPS))
    o_ref[...] = (y * inv).astype(o_ref.dtype)


def _head_pallas(feats, wt, b2, *, out_dtype, tile_b):
    B, K = feats.shape
    K2, N = wt.shape
    assert K == K2 and b2.shape == (1, N)

    c_item = jnp.dtype(wt.dtype).itemsize
    o_item = jnp.dtype(out_dtype).itemsize
    budget = _vmem_budget_bytes()

    # Live buffers: up to 3x feats tile (stream), 2x resident weight, 2x out.
    fixed = 2 * K * N * c_item + 2 * N * 4
    per_row = 3 * K * c_item + 2 * N * o_item
    max_tb = max(8, (budget - fixed) // per_row)
    tb = min(int(tile_b), B, max_tb)
    sub = _sublane_multiple(wt.dtype)
    if tb < B:
        tb = max(sub, (tb // sub) * sub)
    else:
        tb = B
    grid = pl.cdiv(B, tb)

    return pl.pallas_call(
        _head_kernel,
        out_shape=jax.ShapeDtypeStruct((B, N), out_dtype),
        grid_spec=pltpu.PrefetchScalarGridSpec(
            num_scalar_prefetch=0,
            grid=(grid,),
            in_specs=[
                _stream_spec((tb, K), lambda i: (i, 0), triple=grid > 2),  # feats
                pl.BlockSpec((K, N), lambda i: (0, 0)),    # whole weight resident
                pl.BlockSpec((1, N), lambda i: (0, 0)),    # bias resident (f32)
            ],
            out_specs=pl.BlockSpec((tb, N), lambda i: (i, 0)),
        ),
        compiler_params=_compiler_params(budget),
        cost_estimate=pl.CostEstimate(
            flops=2 * B * K * N + 5 * B * N,
            transcendentals=B,
            bytes_accessed=(B * K + K * N) * c_item + N * 4 + B * N * o_item,
        ),
    )(feats, wt, b2)


def make_efficientnetv2s_128_head(w, b, *, compute_dtype=jnp.bfloat16,
                                  out_dtype=None, tile_b=1024):
    """Build the fused fc (PyTorch Linear layout: w (N, K), b (N,)) + L2Norm head.

    The weight transpose, (1, N) bias reshape and bf16 weight cast are hoisted
    here (done once at model init), so a call only pays the feats cast + the
    fused Pallas kernel.
    """
    N, K = w.shape
    assert b.shape == (N,)
    wt = jnp.asarray(w).T.astype(compute_dtype)             # (K, N): lane-dense out
    b2 = jnp.asarray(b).reshape(1, N).astype(jnp.float32)

    def head(feats):
        od = out_dtype if out_dtype is not None else feats.dtype
        # bf16 feats stream: ~2x fewer HBM bytes on the dominant input; under
        # jit this cast fuses into the producer of `feats`.
        return _head_pallas(feats.astype(compute_dtype), wt, b2,
                            out_dtype=od, tile_b=tile_b)

    return head


def efficientnetv2s_128_head(feats, w, b, **kwargs):
    """One-shot convenience wrapper (prefer make_efficientnetv2s_128_head so the
    weight transpose/cast is hoisted out of the per-call path)."""
    return make_efficientnetv2s_128_head(w, b, **kwargs)(feats)


# ----------------------------------------------------------------------------
# Pure-JAX references
# ----------------------------------------------------------------------------
def l2_normalize_ref(x):
    n = jnp.sqrt(jnp.sum(jnp.square(x.astype(jnp.float32)), axis=-1, keepdims=True))
    return (x.astype(jnp.float32) / jnp.maximum(n, EPS)).astype(x.dtype)


def head_ref(feats, w, b):
    y = jnp.dot(feats.astype(jnp.float32), w.astype(jnp.float32).T) + b.astype(jnp.float32)
    return l2_normalize_ref(y)


if __name__ == "__main__":
    key = jax.random.PRNGKey(0)
    k1, k2, k3, k4, k5 = jax.random.split(key, 5)

    # Backbone output features (backbone itself not translated, see TODO above).
    B, K, N = 16, 1280, 128
    feats = jax.random.normal(k1, (B, K), dtype=jnp.float32)
    w = jax.random.normal(k2, (N, K), dtype=jnp.float32) * 0.02
    b = jax.random.normal(k3, (N,), dtype=jnp.float32) * 0.02

    head = make_efficientnetv2s_128_head(w, b)
    out = head(feats)
    jax.block_until_ready(out)
    assert out.shape == (B, N) and out.dtype == feats.dtype

    # Reference on the same bf16 data path (tight) + full-f32 reference (loose).
    feats_bf = feats.astype(jnp.bfloat16).astype(jnp.float32)
    w_bf = w.astype(jnp.bfloat16).astype(jnp.float32)
    ref_bf = head_ref(feats_bf, w_bf, b)
    assert jnp.allclose(out, ref_bf, atol=2e-3, rtol=2e-3), float(
        jnp.max(jnp.abs(out - ref_bf)))
    ref_f32 = head_ref(feats, w, b)
    assert jnp.allclose(out, ref_f32, atol=3e-2, rtol=3e-2)

    # Multi-tile head (exercises triple-buffered feats stream + ragged block).
    B2 = 260
    feats2 = jax.random.normal(k4, (B2, K), dtype=jnp.float32)
    head_small_tiles = make_efficientnetv2s_128_head(w, b, tile_b=64)
    out2 = head_small_tiles(feats2)
    jax.block_until_ready(out2)
    ref2 = head_ref(feats2.astype(jnp.bfloat16).astype(jnp.float32), w_bf, b)
    assert out2.shape == (B2, N)
    assert jnp.allclose(out2, ref2, atol=2e-3, rtol=2e-3)

    # Standalone L2Norm kernel: small 3-D activation-like input (D = 128) ...
    x = jax.random.normal(k5, (2, 8, 128), dtype=jnp.float32)
    out3 = l2_normalize(x)
    jax.block_until_ready(out3)
    assert out3.shape == x.shape and out3.dtype == x.dtype
    assert jnp.allclose(out3, l2_normalize_ref(x), atol=1e-5, rtol=1e-5)

    # ... and a multi-tile ragged case (grid > 2 -> triple-buffered stream).
    kx = jax.random.split(k5)[0]
    xb = jax.random.normal(kx, (1000, 256), dtype=jnp.float32)
    out4 = l2_normalize(xb, tile_rows=256)
    jax.block_until_ready(out4)
    assert jnp.allclose(out4, l2_normalize_ref(xb), atol=1e-5, rtol=1e-5)

    # Narrow-D fallback path (D < 128 -> plain jnp, XLA fuses it).
    xn = jax.random.normal(kx, (4, 64), dtype=jnp.float32)
    assert jnp.allclose(l2_normalize(xn), l2_normalize_ref(xn), atol=1e-5, rtol=1e-5)

    print("KERNEL_OK")
</pallas_src>

<mosaic_0001>
module attributes {stable_mosaic.version = 11 : i64} {
  func.func @_head_kernel(%arg0: i32, %arg1: memref<16x1280xbf16, #tpu.memory_space<vmem>>, %arg2: memref<1280x128xbf16, #tpu.memory_space<vmem>>, %arg3: memref<1x128xf32, #tpu.memory_space<vmem>>, %arg4: memref<16x128xf32, #tpu.memory_space<vmem>>) attributes {dimension_semantics = [#tpu.dimension_semantics<parallel>], iteration_bounds = array<i64: 1>, scalar_prefetch = 0 : i64, scratch_operands = 0 : i64, tpu.core_type = #tpu.core_type<tc>, window_params = [{transform_indices = @transform_0, window_bounds = array<i64: 16, 1280>}, {pipeline_mode = #tpu.pipeline_mode<synchronous>, transform_indices = @transform_1, window_bounds = array<i64: 1280, 128>}, {pipeline_mode = #tpu.pipeline_mode<synchronous>, transform_indices = @transform_2, window_bounds = array<i64: 1, 128>}, {transform_indices = @transform_3, window_bounds = array<i64: 16, 128>}]} {
    %c0 = arith.constant 0 : index
    %c0_0 = arith.constant 0 : index
    %0 = vector.load %arg1[%c0, %c0_0] : memref<16x1280xbf16, #tpu.memory_space<vmem>>, vector<16x1280xbf16>
    %c0_1 = arith.constant 0 : index
    %c0_2 = arith.constant 0 : index
    %1 = vector.load %arg2[%c0_1, %c0_2] : memref<1280x128xbf16, #tpu.memory_space<vmem>>, vector<1280x128xbf16>
    %cst = arith.constant dense<0.000000e+00> : vector<16x128xf32>
    %2 = tpu.matmul %0, %1, %cst {dimension_numbers = #tpu.dot_dimension_numbers<[1], [0], [0], [1], [0, 0, 1, 1], [], []>} : vector<16x1280xbf16>, vector<1280x128xbf16>, vector<16x128xf32> -> vector<16x128xf32>
    %c0_3 = arith.constant 0 : index
    %c0_4 = arith.constant 0 : index
    %3 = vector.load %arg3[%c0_3, %c0_4] : memref<1x128xf32, #tpu.memory_space<vmem>>, vector<1x128xf32>
    %4 = vector.broadcast %3 : vector<1x128xf32> to vector<16x128xf32>
    %5 = arith.addf %2, %4 : vector<16x128xf32>
    %6 = arith.mulf %5, %5 : vector<16x128xf32>
    %cst_5 = arith.constant dense<0.000000e+00> : vector<16xf32>
    %7 = vector.multi_reduction <add>, %6, %cst_5 [1] : vector<16x128xf32> to vector<16xf32>
    %8 = vector.shape_cast %7 : vector<16xf32> to vector<16x1xf32>
    %cst_6 = arith.constant 1.000000e-24 : f32
    %9 = vector.broadcast %cst_6 : f32 to vector<16x1xf32>
    %10 = arith.maximumf %8, %9 : vector<16x1xf32>
    %11 = math.rsqrt %10 : vector<16x1xf32>
    %12 = vector.broadcast %11 : vector<16x1xf32> to vector<16x128xf32>
    %13 = arith.mulf %5, %12 : vector<16x128xf32>
    %c0_7 = arith.constant 0 : index
    %c0_8 = arith.constant 0 : index
    %14 = vector.load %arg4[%c0_7, %c0_8] : memref<16x128xf32, #tpu.memory_space<vmem>>, vector<16x128xf32>
    tpu.vector_store %arg4[%c0_7, %c0_8], %13 {strides = array<i32>} : memref<16x128xf32, #tpu.memory_space<vmem>>, vector<16x128xf32>,
    return
  }
  func.func @transform_0(%arg0: i32) -> (i32, i32) {
    %c0_i32 = arith.constant 0 : i32
    %c0_i32_0 = arith.constant 0 : i32
    return %arg0, %c0_i32 : i32, i32
  }
  func.func @transform_1(%arg0: i32) -> (i32, i32) {
    %c0_i32 = arith.constant 0 : i32
    %c0_i32_0 = arith.constant 0 : i32
    %c0_i32_1 = arith.constant 0 : i32
    return %c0_i32, %c0_i32_0 : i32, i32
  }
  func.func @transform_2(%arg0: i32) -> (i32, i32) {
    %c0_i32 = arith.constant 0 : i32
    %c0_i32_0 = arith.constant 0 : i32
    %c0_i32_1 = arith.constant 0 : i32
    return %c0_i32, %c0_i32_0 : i32, i32
  }
  func.func @transform_3(%arg0: i32) -> (i32, i32) {
    %c0_i32 = arith.constant 0 : i32
    %c0_i32_0 = arith.constant 0 : i32
    return %arg0, %c0_i32 : i32, i32
  }
}

</mosaic_0001>

<llo_original>
// kernel: tpu_custom_call.1
$region0: #{tpu_custom_call.1}
  #allocation0 [shape = 'u32[]', space=smem, size = 0x4, offset = 0x4, fixed_abs, tag = 'smem constant byte address 0x4 - core index']
  #allocation1 [shape = 'u32[144,128]{1,0:T(1,128)}', space=vmem, size = 0x12000, scoped, tag = 'internal scratch']
  %s0 = inlined_call_operand.hbm [shape: bf16[16,1280], index: 0, kind: input, shape index: {}]
  %s1 = inlined_call_operand.hbm [shape: bf16[1280,128], index: 1, kind: input, shape index: {}]
  %s2 = inlined_call_operand.vmem [shape: f32[1,128], index: 2, kind: input, shape index: {}]
  %s3 = inlined_call_operand.hbm [shape: f32[16,128], index: 3, kind: output, shape index: {}]
  %s4 = sld [smem:[#allocation0]]
  $region30: #{tpu_custom_call.1} parent=0
    _
  %s6 = ssub.s32 1, %s4
  %s7 = scalar_select 0, %s6, %s4
  $region1: #{tpu_custom_call.1} parent=0
    #allocation2 [shape = 'u8[40960]{0}', space=vmem, size = 0xa000, scoped, tag = 'input window, operand 0, single buffered']
    #allocation3 [shape = 's32[1]{0}', space=sflag, size = 0x4, scoped, tag = 'scoped memory for tpu_custom_call.1']
    #allocation4 [shape = 's32[1]{0}', space=sflag, size = 0x4, scoped, tag = 'scoped memory for tpu_custom_call.1']
    #allocation5 [shape = 'u8[327680]{0}', space=vmem, size = 0x50000, scoped, tag = 'input window, operand 1, single buffered']
    #allocation6 [shape = 's32[1]{0}', space=sflag, size = 0x4, scoped, tag = 'scoped memory for tpu_custom_call.1']
    #allocation7 [shape = 'u8[8192]{0}', space=vmem, size = 0x2000, scoped, tag = 'output window, operand 0, single buffered']
    %8 = vsyncpa [#allocation3], 0
    %9 = vsyncpa [#allocation6], 0
    %10 = vsyncpa [#allocation4], 0
    // Predicated region
    $region2: #{tpu_custom_call.1} parent=1 // pred_check
      _
    $region3: #{tpu_custom_call.1} parent=1 // pred_check_branch
      %12 = sbr.rel (0) target = $region5
    $region4: #{tpu_custom_call.1} parent=1 // pred_region
      %s14 = ssub.s32 1280, 1280
      %15 = vsyncadd [#allocation3], %s14
      %s16 = sshll.u32 [#allocation2], 4
      %s17 = int_to_ptr.vmem [resolvable:$true] %s16
      %22 = dma.hbm_to_vmem [thread:$0]  %s0, 1280, %s17, [#allocation3], 640, 640, 40
    $region5: #{tpu_custom_call.1} parent=1 // pred_fallthru
      _
    // Predicated region
    $region6: #{tpu_custom_call.1} parent=1 // pred_check
      _
    $region7: #{tpu_custom_call.1} parent=1 // pred_check_branch
      %24 = sbr.rel (0) target = $region9
    $region8: #{tpu_custom_call.1} parent=1 // pred_region
      %s26 = ssub.s32 10240, 10240
      %27 = vsyncadd [#allocation6], %s26
      %s28 = sshll.u32 [#allocation5], 4
      %s29 = int_to_ptr.vmem [resolvable:$true] %s28
      %34 = dma.hbm_to_vmem [thread:$0]  %s1, 10240, %s29, [#allocation6], 64, 64, 4
    $region9: #{tpu_custom_call.1} parent=1 // pred_fallthru
      _
    // Predicated region
    $region10: #{tpu_custom_call.1} parent=1 // pred_check
      _
    $region11: #{tpu_custom_call.1} parent=1 // pred_check_branch
      %36 = sbr.rel (0) target = $region13
    $region12: #{tpu_custom_call.1} parent=1 // pred_region
      _
    $region13: #{tpu_custom_call.1} parent=1 // pred_fallthru
      _
    // Predicated region
    $region14: #{tpu_custom_call.1} parent=1 // pred_check
      _
    $region15: #{tpu_custom_call.1} parent=1 // pred_check_branch
      %38 = sbr.rel (0) target = $region17
    $region16: #{tpu_custom_call.1} parent=1 // pred_region
      %39 = dma.done [#allocation3], 1280
    $region17: #{tpu_custom_call.1} parent=1 // pred_fallthru
      _
    // Predicated region
    $region18: #{tpu_custom_call.1} parent=1 // pred_check
      _
    $region19: #{tpu_custom_call.1} parent=1 // pred_check_branch
      %41 = sbr.rel (0) target = $region21
    $region20: #{tpu_custom_call.1} parent=1 // pred_region
      %42 = dma.done [#allocation6], 10240
    $region21: #{tpu_custom_call.1} parent=1 // pred_fallthru
      _
    %v44 = vld [vmem:[#allocation2] sm:$0xff]
    %v45 = vld [vmem:[#allocation2 + $0x8] sm:$0xff]
    %v46 = vld [vmem:[#allocation2 + $0x10] sm:$0xff]
    %v47 = vld [vmem:[#allocation2 + $0x18] sm:$0xff]
    %v48 = vld [vmem:[#allocation2 + $0x20] sm:$0xff]
    %v49 = vld [vmem:[#allocation2 + $0x28] sm:$0xff]
    %v50 = vld [vmem:[#allocation2 + $0x30] sm:$0xff]
    %v51 = vld [vmem:[#allocation2 + $0x38] sm:$0xff]
    %v52 = vld [vmem:[#allocation2 + $0x40] sm:$0xff]
    %v53 = vld [vmem:[#allocation2 + $0x48] sm:$0xff]
    %v54 = vld [vmem:[#allocation5] sm:$0xf]
    %v55 = vld [vmem:[#allocation5 + $0x4] sm:$0xf]
    %v56 = vld [vmem:[#allocation5 + $0x8] sm:$0xf]
    %v57 = vld [vmem:[#allocation5 + $0xc] sm:$0xf]
    %v58 = vld [vmem:[#allocation5 + $0x10] sm:$0xf]
    %v59 = vld [vmem:[#allocation5 + $0x14] sm:$0xf]
    %v60 = vld [vmem:[#allocation5 + $0x18] sm:$0xf]
    %v61 = vld [vmem:[#allocation5 + $0x1c] sm:$0xf]
    %v62 = vld [vmem:[#allocation5 + $0x20] sm:$0xf]
    %v63 = vld [vmem:[#allocation5 + $0x24] sm:$0xf]
    %v64 = vld [vmem:[#allocation5 + $0x28] sm:$0xf]
    %v65 = vld [vmem:[#allocation5 + $0x2c] sm:$0xf]
    %v66 = vld [vmem:[#allocation5 + $0x30] sm:$0xf]
    %v67 = vld [vmem:[#allocation5 + $0x34] sm:$0xf]
    %v68 = vld [vmem:[#allocation5 + $0x38] sm:$0xf]
    %v69 = vld [vmem:[#allocation5 + $0x3c] sm:$0xf]
    %v70 = vld [vmem:[#allocation5 + $0x40] sm:$0xf]
    %v71 = vld [vmem:[#allocation5 + $0x44] sm:$0xf]
    %v72 = vld [vmem:[#allocation5 + $0x48] sm:$0xf]
    %v73 = vld [vmem:[#allocation5 + $0x4c] sm:$0xf]
    %v74 = vld [vmem:[#allocation5 + $0x50] sm:$0xf]
    %v75 = vld [vmem:[#allocation5 + $0x54] sm:$0xf]
    %v76 = vld [vmem:[#allocation5 + $0x58] sm:$0xf]
    %v77 = vld [vmem:[#allocation5 + $0x5c] sm:$0xf]
    %v78 = vld [vmem:[#allocation5 + $0x60] sm:$0xf]
    %v79 = vld [vmem:[#allocation5 + $0x64] sm:$0xf]
    %v80 = vld [vmem:[#allocation5 + $0x68] sm:$0xf]
    %v81 = vld [vmem:[#allocation5 + $0x6c] sm:$0xf]
    %v82 = vld [vmem:[#allocation5 + $0x70] sm:$0xf]
    %v83 = vld [vmem:[#allocation5 + $0x74] sm:$0xf]
    %v84 = vld [vmem:[#allocation5 + $0x78] sm:$0xf]
    %v85 = vld [vmem:[#allocation5 + $0x7c] sm:$0xf]
    %v86 = vld [vmem:[#allocation5 + $0x80] sm:$0xf]
    %v87 = vld [vmem:[#allocation5 + $0x84] sm:$0xf]
    %v88 = vld [vmem:[#allocation5 + $0x88] sm:$0xf]
    %v89 = vld [vmem:[#allocation5 + $0x8c] sm:$0xf]
    %v90 = vld [vmem:[#allocation5 + $0x90] sm:$0xf]
    %v91 = vld [vmem:[#allocation5 + $0x94] sm:$0xf]
    %v92 = vld [vmem:[#allocation5 + $0x98] sm:$0xf]
    %v93 = vld [vmem:[#allocation5 + $0x9c] sm:$0xf]
    %v94 = vld [vmem:[#allocation5 + $0xa0] sm:$0xf]
    %v95 = vld [vmem:[#allocation5 + $0xa4] sm:$0xf]
    %v96 = vld [vmem:[#allocation5 + $0xa8] sm:$0xf]
    %v97 = vld [vmem:[#allocation5 + $0xac] sm:$0xf]
    %v98 = vld [vmem:[#allocation5 + $0xb0] sm:$0xf]
    %v99 = vld [vmem:[#allocation5 + $0xb4] sm:$0xf]
    %v100 = vld [vmem:[#allocation5 + $0xb8] sm:$0xf]
    %v101 = vld [vmem:[#allocation5 + $0xbc] sm:$0xf]
    %v102 = vld [vmem:[#allocation5 + $0xc0] sm:$0xf]
    %v103 = vld [vmem:[#allocation5 + $0xc4] sm:$0xf]
    %v104 = vld [vmem:[#allocation5 + $0xc8] sm:$0xf]
    %v105 = vld [vmem:[#allocation5 + $0xcc] sm:$0xf]
    %v106 = vld [vmem:[#allocation5 + $0xd0] sm:$0xf]
    %v107 = vld [vmem:[#allocation5 + $0xd4] sm:$0xf]
    %v108 = vld [vmem:[#allocation5 + $0xd8] sm:$0xf]
    %v109 = vld [vmem:[#allocation5 + $0xdc] sm:$0xf]
    %v110 = vld [vmem:[#allocation5 + $0xe0] sm:$0xf]
    %v111 = vld [vmem:[#allocation5 + $0xe4] sm:$0xf]
    %v112 = vld [vmem:[#allocation5 + $0xe8] sm:$0xf]
    %v113 = vld [vmem:[#allocation5 + $0xec] sm:$0xf]
    %v114 = vld [vmem:[#allocation5 + $0xf0] sm:$0xf]
    %v115 = vld [vmem:[#allocation5 + $0xf4] sm:$0xf]
    %v116 = vld [vmem:[#allocation5 + $0xf8] sm:$0xf]
    %v117 = vld [vmem:[#allocation5 + $0xfc] sm:$0xf]
    %v118 = vld [vmem:[#allocation5 + $0x100] sm:$0xf]
    %v119 = vld [vmem:[#allocation5 + $0x104] sm:$0xf]
    %v120 = vld [vmem:[#allocation5 + $0x108] sm:$0xf]
    %v121 = vld [vmem:[#allocation5 + $0x10c] sm:$0xf]
    %v122 = vld [vmem:[#allocation5 + $0x110] sm:$0xf]
    %v123 = vld [vmem:[#allocation5 + $0x114] sm:$0xf]
    %v124 = vld [vmem:[#allocation5 + $0x118] sm:$0xf]
    %v125 = vld [vmem:[#allocation5 + $0x11c] sm:$0xf]
    %v126 = vld [vmem:[#allocation5 + $0x120] sm:$0xf]
    %v127 = vld [vmem:[#allocation5 + $0x124] sm:$0xf]
    %v128 = vld [vmem:[#allocation5 + $0x128] sm:$0xf]
    %v129 = vld [vmem:[#allocation5 + $0x12c] sm:$0xf]
    %v130 = vld [vmem:[#allocation5 + $0x130] sm:$0xf]
    %v131 = vld [vmem:[#allocation5 + $0x134] sm:$0xf]
    %v132 = vld [vmem:[#allocation5 + $0x138] sm:$0xf]
    %v133 = vld [vmem:[#allocation5 + $0x13c] sm:$0xf]
    %v134 = vld [vmem:[#allocation5 + $0x140] sm:$0xf]
    %v135 = vld [vmem:[#allocation5 + $0x144] sm:$0xf]
    %v136 = vld [vmem:[#allocation5 + $0x148] sm:$0xf]
    %v137 = vld [vmem:[#allocation5 + $0x14c] sm:$0xf]
    %v138 = vld [vmem:[#allocation5 + $0x150] sm:$0xf]
    %v139 = vld [vmem:[#allocation5 + $0x154] sm:$0xf]
    %v140 = vld [vmem:[#allocation5 + $0x158] sm:$0xf]
    %v141 = vld [vmem:[#allocation5 + $0x15c] sm:$0xf]
    %v142 = vld [vmem:[#allocation5 + $0x160] sm:$0xf]
    %v143 = vld [vmem:[#allocation5 + $0x164] sm:$0xf]
    %v144 = vld [vmem:[#allocation5 + $0x168] sm:$0xf]
    %v145 = vld [vmem:[#allocation5 + $0x16c] sm:$0xf]
    %v146 = vld [vmem:[#allocation5 + $0x170] sm:$0xf]
    %v147 = vld [vmem:[#allocation5 + $0x174] sm:$0xf]
    %v148 = vld [vmem:[#allocation5 + $0x178] sm:$0xf]
    %v149 = vld [vmem:[#allocation5 + $0x17c] sm:$0xf]
    %v150 = vld [vmem:[#allocation5 + $0x180] sm:$0xf]
    %v151 = vld [vmem:[#allocation5 + $0x184] sm:$0xf]
    %v152 = vld [vmem:[#allocation5 + $0x188] sm:$0xf]
    %v153 = vld [vmem:[#allocation5 + $0x18c] sm:$0xf]
    %v154 = vld [vmem:[#allocation5 + $0x190] sm:$0xf]
    %v155 = vld [vmem:[#allocation5 + $0x194] sm:$0xf]
    %v156 = vld [vmem:[#allocation5 + $0x198] sm:$0xf]
    %v157 = vld [vmem:[#allocation5 + $0x19c] sm:$0xf]
    %v158 = vld [vmem:[#allocation5 + $0x1a0] sm:$0xf]
    %v159 = vld [vmem:[#allocation5 + $0x1a4] sm:$0xf]
    %v160 = vld [vmem:[#allocation5 + $0x1a8] sm:$0xf]
    %v161 = vld [vmem:[#allocation5 + $0x1ac] sm:$0xf]
    %v162 = vld [vmem:[#allocation5 + $0x1b0] sm:$0xf]
    %v163 = vld [vmem:[#allocation5 + $0x1b4] sm:$0xf]
    %v164 = vld [vmem:[#allocation5 + $0x1b8] sm:$0xf]
    %v165 = vld [vmem:[#allocation5 + $0x1bc] sm:$0xf]
    %v166 = vld [vmem:[#allocation5 + $0x1c0] sm:$0xf]
    %v167 = vld [vmem:[#allocation5 + $0x1c4] sm:$0xf]
    %v168 = vld [vmem:[#allocation5 + $0x1c8] sm:$0xf]
    %v169 = vld [vmem:[#allocation5 + $0x1cc] sm:$0xf]
    %v170 = vld [vmem:[#allocation5 + $0x1d0] sm:$0xf]
    %v171 = vld [vmem:[#allocation5 + $0x1d4] sm:$0xf]
    %v172 = vld [vmem:[#allocation5 + $0x1d8] sm:$0xf]
    %v173 = vld [vmem:[#allocation5 + $0x1dc] sm:$0xf]
    %v174 = vld [vmem:[#allocation5 + $0x1e0] sm:$0xf]
    %v175 = vld [vmem:[#allocation5 + $0x1e4] sm:$0xf]
    %v176 = vld [vmem:[#allocation5 + $0x1e8] sm:$0xf]
    %v177 = vld [vmem:[#allocation5 + $0x1ec] sm:$0xf]
    %v178 = vld [vmem:[#allocation5 + $0x1f0] sm:$0xf]
    %v179 = vld [vmem:[#allocation5 + $0x1f4] sm:$0xf]
    %v180 = vld [vmem:[#allocation5 + $0x1f8] sm:$0xf]
    %v181 = vld [vmem:[#allocation5 + $0x1fc] sm:$0xf]
    %v182 = vld [vmem:[#allocation5 + $0x200] sm:$0xf]
    %v183 = vld [vmem:[#allocation5 + $0x204] sm:$0xf]
    %v184 = vld [vmem:[#allocation5 + $0x208] sm:$0xf]
    %v185 = vld [vmem:[#allocation5 + $0x20c] sm:$0xf]
    %v186 = vld [vmem:[#allocation5 + $0x210] sm:$0xf]
    %v187 = vld [vmem:[#allocation5 + $0x214] sm:$0xf]
    %v188 = vld [vmem:[#allocation5 + $0x218] sm:$0xf]
    %v189 = vld [vmem:[#allocation5 + $0x21c] sm:$0xf]
    %v190 = vld [vmem:[#allocation5 + $0x220] sm:$0xf]
    %v191 = vld [vmem:[#allocation5 + $0x224] sm:$0xf]
    %v192 = vld [vmem:[#allocation5 + $0x228] sm:$0xf]
    %v193 = vld [vmem:[#allocation5 + $0x22c] sm:$0xf]
    %v194 = vld [vmem:[#allocation5 + $0x230] sm:$0xf]
    %v195 = vld [vmem:[#allocation5 + $0x234] sm:$0xf]
    %v196 = vld [vmem:[#allocation5 + $0x238] sm:$0xf]
    %v197 = vld [vmem:[#allocation5 + $0x23c] sm:$0xf]
    %v198 = vld [vmem:[#allocation5 + $0x240] sm:$0xf]
    %v199 = vld [vmem:[#allocation5 + $0x244] sm:$0xf]
    %v200 = vld [vmem:[#allocation5 + $0x248] sm:$0xf]
    %v201 = vld [vmem:[#allocation5 + $0x24c] sm:$0xf]
    %v202 = vld [vmem:[#allocation5 + $0x250] sm:$0xf]
    %v203 = vld [vmem:[#allocation5 + $0x254] sm:$0xf]
    %v204 = vld [vmem:[#allocation5 + $0x258] sm:$0xf]
    %v205 = vld [vmem:[#allocation5 + $0x25c] sm:$0xf]
    %v206 = vld [vmem:[#allocation5 + $0x260] sm:$0xf]
    %v207 = vld [vmem:[#allocation5 + $0x264] sm:$0xf]
    %v208 = vld [vmem:[#allocation5 + $0x268] sm:$0xf]
    %v209 = vld [vmem:[#allocation5 + $0x26c] sm:$0xf]
    %v210 = vld [vmem:[#allocation5 + $0x270] sm:$0xf]
    %v211 = vld [vmem:[#allocation5 + $0x274] sm:$0xf]
    %v212 = vld [vmem:[#allocation5 + $0x278] sm:$0xf]
    %v213 = vld [vmem:[#allocation5 + $0x27c] sm:$0xf]
    %v214 = vld [vmem:[%s2] sm:$0x1]
    %v216 = vlaneseq
    %v217 = vshrl.u32 %v216, 7
    %v218 = vsub.s32 0, %v217
    %v219 = vrot.slane %v214, %v218
    %v231 = vunpack.c.l.b16 %v44
    %v232 = vunpack.c.h.b16 %v44
    %v233 = vunpack.c.l.b16 %v45
    %v234 = vunpack.c.h.b16 %v45
    %v235 = vunpack.c.l.b16 %v46
    %v236 = vunpack.c.h.b16 %v46
    %v237 = vunpack.c.l.b16 %v47
    %v238 = vunpack.c.h.b16 %v47
    %v239 = vunpack.c.l.b16 %v48
    %v240 = vunpack.c.h.b16 %v48
    %v241 = vunpack.c.l.b16 %v49
    %v242 = vunpack.c.h.b16 %v49
    %v243 = vunpack.c.l.b16 %v50
    %v244 = vunpack.c.h.b16 %v50
    %v245 = vunpack.c.l.b16 %v51
    %v246 = vunpack.c.h.b16 %v51
    %v247 = vunpack.c.l.b16 %v52
    %v248 = vunpack.c.h.b16 %v52
    %v249 = vunpack.c.l.b16 %v53
    %v250 = vunpack.c.h.b16 %v53
    %v251 = vpack.c.b16 %v241, %v231
    %v252 = vpack.c.b16 %v242, %v232
    %v253 = vpack.c.b16 %v243, %v233
    %v254 = vpack.c.b16 %v244, %v234
    %v255 = vpack.c.b16 %v245, %v235
    %v256 = vpack.c.b16 %v246, %v236
    %v257 = vpack.c.b16 %v247, %v237
    %v258 = vpack.c.b16 %v248, %v238
    %v259 = vpack.c.b16 %v249, %v239
    %v260 = vpack.c.b16 %v250, %v240
    %v431 = vunpack.c.l.b16 %v54
    %v432 = vunpack.c.l.b16 %v55
    %v433 = vunpack.c.l.b16 %v56
    %v434 = vunpack.c.l.b16 %v57
    %v435 = vunpack.c.l.b16 %v58
    %v436 = vunpack.c.l.b16 %v59
    %v437 = vunpack.c.l.b16 %v60
    %v438 = vunpack.c.l.b16 %v61
    %v439 = vunpack.c.l.b16 %v62
    %v440 = vunpack.c.l.b16 %v63
    %v441 = vunpack.c.l.b16 %v64
    %v442 = vunpack.c.l.b16 %v65
    %v443 = vunpack.c.l.b16 %v66
    %v444 = vunpack.c.l.b16 %v67
    %v445 = vunpack.c.l.b16 %v68
    %v446 = vunpack.c.l.b16 %v69
    %v447 = vunpack.c.l.b16 %v70
    %v448 = vunpack.c.l.b16 %v71
    %v449 = vunpack.c.l.b16 %v72
    %v450 = vunpack.c.l.b16 %v73
    %v451 = vunpack.c.l.b16 %v74
    %v452 = vunpack.c.l.b16 %v75
    %v453 = vunpack.c.l.b16 %v76
    %v454 = vunpack.c.l.b16 %v77
    %v455 = vunpack.c.l.b16 %v78
    %v456 = vunpack.c.l.b16 %v79
    %v457 = vunpack.c.l.b16 %v80
    %v458 = vunpack.c.l.b16 %v81
    %v459 = vunpack.c.l.b16 %v82
    %v460 = vunpack.c.l.b16 %v83
    %v461 = vunpack.c.l.b16 %v84
    %v462 = vunpack.c.l.b16 %v85
    %v463 = vunpack.c.l.b16 %v86
    %v464 = vunpack.c.l.b16 %v87
    %v465 = vunpack.c.l.b16 %v88
    %v466 = vunpack.c.l.b16 %v89
    %v467 = vunpack.c.l.b16 %v90
    %v468 = vunpack.c.l.b16 %v91
    %v469 = vunpack.c.l.b16 %v92
    %v470 = vunpack.c.l.b16 %v93
    %v471 = vunpack.c.l.b16 %v94
    %v472 = vunpack.c.l.b16 %v95
    %v473 = vunpack.c.l.b16 %v96
    %v474 = vunpack.c.l.b16 %v97
    %v475 = vunpack.c.l.b16 %v98
    %v476 = vunpack.c.l.b16 %v99
    %v477 = vunpack.c.l.b16 %v100
    %v478 = vunpack.c.l.b16 %v101
    %v479 = vunpack.c.l.b16 %v102
    %v480 = vunpack.c.l.b16 %v103
    %v481 = vunpack.c.l.b16 %v104
    %v482 = vunpack.c.l.b16 %v105
    %v483 = vunpack.c.l.b16 %v106
    %v484 = vunpack.c.l.b16 %v107
    %v485 = vunpack.c.l.b16 %v108
    %v486 = vunpack.c.l.b16 %v109
    %v487 = vunpack.c.l.b16 %v110
    %v488 = vunpack.c.l.b16 %v111
    %v489 = vunpack.c.l.b16 %v112
    %v490 = vunpack.c.l.b16 %v113
    %v491 = vunpack.c.l.b16 %v114
    %v492 = vunpack.c.l.b16 %v115
    %v493 = vunpack.c.l.b16 %v116
    %v494 = vunpack.c.l.b16 %v117
    %v495 = vunpack.c.l.b16 %v118
    %v496 = vunpack.c.l.b16 %v119
    %v497 = vunpack.c.l.b16 %v120
    %v498 = vunpack.c.l.b16 %v121
    %v499 = vunpack.c.l.b16 %v122
    %v500 = vunpack.c.l.b16 %v123
    %v501 = vunpack.c.l.b16 %v124
    %v502 = vunpack.c.l.b16 %v125
    %v503 = vunpack.c.l.b16 %v126
    %v504 = vunpack.c.l.b16 %v127
    %v505 = vunpack.c.l.b16 %v128
    %v506 = vunpack.c.l.b16 %v129
    %v507 = vunpack.c.l.b16 %v130
    %v508 = vunpack.c.l.b16 %v131
    %v509 = vunpack.c.l.b16 %v132
    %v510 = vunpack.c.l.b16 %v133
    %v511 = vunpack.c.l.b16 %v134
    %v512 = vunpack.c.l.b16 %v135
    %v513 = vunpack.c.l.b16 %v136
    %v514 = vunpack.c.l.b16 %v137
    %v515 = vunpack.c.l.b16 %v138
    %v516 = vunpack.c.l.b16 %v139
    %v517 = vunpack.c.l.b16 %v140
    %v518 = vunpack.c.l.b16 %v141
    %v519 = vunpack.c.l.b16 %v142
    %v520 = vunpack.c.l.b16 %v143
    %v521 = vunpack.c.l.b16 %v144
    %v522 = vunpack.c.l.b16 %v145
    %v523 = vunpack.c.l.b16 %v146
    %v524 = vunpack.c.l.b16 %v147
    %v525 = vunpack.c.l.b16 %v148
    %v526 = vunpack.c.l.b16 %v149
    %v527 = vunpack.c.l.b16 %v150
    %v528 = vunpack.c.l.b16 %v151
    %v529 = vunpack.c.l.b16 %v152
    %v530 = vunpack.c.l.b16 %v153
    %v531 = vunpack.c.l.b16 %v154
    %v532 = vunpack.c.l.b16 %v155
    %v533 = vunpack.c.l.b16 %v156
    %v534 = vunpack.c.l.b16 %v157
    %v535 = vunpack.c.l.b16 %v158
    %v536 = vunpack.c.l.b16 %v159
    %v537 = vunpack.c.l.b16 %v160
    %v538 = vunpack.c.l.b16 %v161
    %v539 = vunpack.c.l.b16 %v162
    %v540 = vunpack.c.l.b16 %v163
    %v541 = vunpack.c.l.b16 %v164
    %v542 = vunpack.c.l.b16 %v165
    %v543 = vunpack.c.l.b16 %v166
    %v544 = vunpack.c.l.b16 %v167
    %v545 = vunpack.c.l.b16 %v168
    %v546 = vunpack.c.l.b16 %v169
    %v547 = vunpack.c.l.b16 %v170
    %v548 = vunpack.c.l.b16 %v171
    %v549 = vunpack.c.l.b16 %v172
    %v550 = vunpack.c.l.b16 %v173
    %v551 = vunpack.c.l.b16 %v174
    %v552 = vunpack.c.l.b16 %v175
    %v553 = vunpack.c.l.b16 %v176
    %v554 = vunpack.c.l.b16 %v177
    %v555 = vunpack.c.l.b16 %v178
    %v556 = vunpack.c.l.b16 %v179
    %v557 = vunpack.c.l.b16 %v180
    %v558 = vunpack.c.l.b16 %v181
    %v559 = vunpack.c.l.b16 %v182
    %v560 = vunpack.c.l.b16 %v183
    %v561 = vunpack.c.l.b16 %v184
    %v562 = vunpack.c.l.b16 %v185
    %v563 = vunpack.c.l.b16 %v186
    %v564 = vunpack.c.l.b16 %v187
    %v565 = vunpack.c.l.b16 %v188
    %v566 = vunpack.c.l.b16 %v189
    %v567 = vunpack.c.l.b16 %v190
    %v568 = vunpack.c.l.b16 %v191
    %v569 = vunpack.c.l.b16 %v192
    %v570 = vunpack.c.l.b16 %v193
    %v571 = vunpack.c.l.b16 %v194
    %v572 = vunpack.c.l.b16 %v195
    %v573 = vunpack.c.l.b16 %v196
    %v574 = vunpack.c.l.b16 %v197
    %v575 = vunpack.c.l.b16 %v198
    %v576 = vunpack.c.l.b16 %v199
    %v577 = vunpack.c.l.b16 %v200
    %v578 = vunpack.c.l.b16 %v201
    %v579 = vunpack.c.l.b16 %v202
    %v580 = vunpack.c.l.b16 %v203
    %v581 = vunpack.c.l.b16 %v204
    %v582 = vunpack.c.l.b16 %v205
    %v583 = vunpack.c.l.b16 %v206
    %v584 = vunpack.c.l.b16 %v207
    %v585 = vunpack.c.l.b16 %v208
    %v586 = vunpack.c.l.b16 %v209
    %v587 = vunpack.c.l.b16 %v210
    %v588 = vunpack.c.l.b16 %v211
    %v589 = vunpack.c.l.b16 %v212
    %v590 = vunpack.c.l.b16 %v213
    %v591 = vpack.c.b16 %v432, %v431
    %v592 = vpack.c.b16 %v434, %v433
    %v593 = vpack.c.b16 %v436, %v435
    %v594 = vpack.c.b16 %v438, %v437
    %v595 = vpack.c.b16 %v440, %v439
    %v596 = vpack.c.b16 %v442, %v441
    %v597 = vpack.c.b16 %v444, %v443
    %v598 = vpack.c.b16 %v446, %v445
    %v599 = vpack.c.b16 %v448, %v447
    %v600 = vpack.c.b16 %v450, %v449
    %v601 = vpack.c.b16 %v452, %v451
    %v602 = vpack.c.b16 %v454, %v453
    %v603 = vpack.c.b16 %v456, %v455
    %v604 = vpack.c.b16 %v458, %v457
    %v605 = vpack.c.b16 %v460, %v459
    %v606 = vpack.c.b16 %v462, %v461
    %v607 = vpack.c.b16 %v464, %v463
    %v608 = vpack.c.b16 %v466, %v465
    %v609 = vpack.c.b16 %v468, %v467
    %v610 = vpack.c.b16 %v470, %v469
    %v611 = vpack.c.b16 %v472, %v471
    %v612 = vpack.c.b16 %v474, %v473
    %v613 = vpack.c.b16 %v476, %v475
    %v614 = vpack.c.b16 %v478, %v477
    %v615 = vpack.c.b16 %v480, %v479
    %v616 = vpack.c.b16 %v482, %v481
    %v617 = vpack.c.b16 %v484, %v483
    %v618 = vpack.c.b16 %v486, %v485
    %v619 = vpack.c.b16 %v488, %v487
    %v620 = vpack.c.b16 %v490, %v489
    %v621 = vpack.c.b16 %v492, %v491
    %v622 = vpack.c.b16 %v494, %v493
    %v623 = vpack.c.b16 %v496, %v495
    %v624 = vpack.c.b16 %v498, %v497
    %v625 = vpack.c.b16 %v500, %v499
    %v626 = vpack.c.b16 %v502, %v501
    %v627 = vpack.c.b16 %v504, %v503
    %v628 = vpack.c.b16 %v506, %v505
    %v629 = vpack.c.b16 %v508, %v507
    %v630 = vpack.c.b16 %v510, %v509
    %v631 = vpack.c.b16 %v512, %v511
    %v632 = vpack.c.b16 %v514, %v513
    %v633 = vpack.c.b16 %v516, %v515
    %v634 = vpack.c.b16 %v518, %v517
    %v635 = vpack.c.b16 %v520, %v519
    %v636 = vpack.c.b16 %v522, %v521
    %v637 = vpack.c.b16 %v524, %v523
    %v638 = vpack.c.b16 %v526, %v525
    %v639 = vpack.c.b16 %v528, %v527
    %v640 = vpack.c.b16 %v530, %v529
    %v641 = vpack.c.b16 %v532, %v531
    %v642 = vpack.c.b16 %v534, %v533
    %v643 = vpack.c.b16 %v536, %v535
    %v644 = vpack.c.b16 %v538, %v537
    %v645 = vpack.c.b16 %v540, %v539
    %v646 = vpack.c.b16 %v542, %v541
    %v647 = vpack.c.b16 %v544, %v543
    %v648 = vpack.c.b16 %v546, %v545
    %v649 = vpack.c.b16 %v548, %v547
    %v650 = vpack.c.b16 %v550, %v549
    %v651 = vpack.c.b16 %v552, %v551
    %v652 = vpack.c.b16 %v554, %v553
    %v653 = vpack.c.b16 %v556, %v555
    %v654 = vpack.c.b16 %v558, %v557
    %v655 = vpack.c.b16 %v560, %v559
    %v656 = vpack.c.b16 %v562, %v561
    %v657 = vpack.c.b16 %v564, %v563
    %v658 = vpack.c.b16 %v566, %v565
    %v659 = vpack.c.b16 %v568, %v567
    %v660 = vpack.c.b16 %v570, %v569
    %v661 = vpack.c.b16 %v572, %v571
    %v662 = vpack.c.b16 %v574, %v573
    %v663 = vpack.c.b16 %v576, %v575
    %v664 = vpack.c.b16 %v578, %v577
    %v665 = vpack.c.b16 %v580, %v579
    %v666 = vpack.c.b16 %v582, %v581
    %v667 = vpack.c.b16 %v584, %v583
    %v668 = vpack.c.b16 %v586, %v585
    %v669 = vpack.c.b16 %v588, %v587
    %v670 = vpack.c.b16 %v590, %v589
    %751 = vmatprep.subr.bf16.mxu0 0
    %752 = vmatpush1.bf16.msra.mxu0 %v598
    %753 = vmatprep.subr.bf16.mxu0 0
    %754 = vmatpush1.bf16.msra.mxu0 %v597
    %755 = vmatprep.subr.bf16.mxu0 0
    %756 = vmatpush1.bf16.msra.mxu0 %v596
    %757 = vmatprep.subr.bf16.mxu0 0
    %758 = vmatpush1.bf16.msra.mxu0 %v595
    %759 = vmatprep.subr.bf16.mxu0 0
    %760 = vmatpush1.bf16.msra.mxu0 %v594
    %761 = vmatprep.subr.bf16.mxu0 0
    %762 = vmatpush1.bf16.msra.mxu0 %v593
    %763 = vmatprep.subr.bf16.mxu0 0
    %764 = vmatpush1.bf16.msra.mxu0 %v592
    %765 = vmatprep.subr.bf16.mxu0 0
    %766 = vmatpush1.bf16.msra.mxu0 %v591
    %767 = vmatprep.subr.bf16.mxu0 0
    %768 = vmatpush2.bf16.msra.mxu0 %v606
    %769 = vmatprep.subr.bf16.mxu0 0
    %770 = vmatpush2.bf16.msra.mxu0 %v605
    %771 = vmatprep.subr.bf16.mxu0 0
    %772 = vmatpush2.bf16.msra.mxu0 %v604
    %773 = vmatprep.subr.bf16.mxu0 0
    %774 = vmatpush2.bf16.msra.mxu0 %v603
    %775 = vmatprep.subr.bf16.mxu0 0
    %776 = vmatpush2.bf16.msra.mxu0 %v602
    %777 = vmatprep.subr.bf16.mxu0 0
    %778 = vmatpush2.bf16.msra.mxu0 %v601
    %779 = vmatprep.subr.bf16.mxu0 0
    %780 = vmatpush2.bf16.msra.mxu0 %v600
    %781 = vmatprep.subr.bf16.mxu0 0
    %782 = vmatpush2.bf16.msra.mxu0 %v599
    %783 = vmatprep.mubr.bf16.mxu0 %v252
    %784 = vmatmul.mubr.bf16.gmra.mxu0 %v251
    %v785 = vpop.f32.mrf.mxu0
    %v786 = vadd.f32 %v219, %v785
    %v787 = vpop.f32.mrf.mxu0
    %v788 = vpop.f32.mrf.mxu0
    %v789 = vadd.f32 %v219, %v788
    %v790 = vpop.f32.mrf.mxu0
    %791 = vdwg.mxu0
    %792 = vmatprep.subr.bf16.mxu0 0
    %793 = vmatpush1.bf16.msra.mxu0 %v614
    %794 = vmatprep.subr.bf16.mxu0 0
    %795 = vmatpush1.bf16.msra.mxu0 %v613
    %796 = vmatprep.subr.bf16.mxu0 0
    %797 = vmatpush1.bf16.msra.mxu0 %v612
    %798 = vmatprep.subr.bf16.mxu0 0
    %799 = vmatpush1.bf16.msra.mxu0 %v611
    %800 = vmatprep.subr.bf16.mxu0 0
    %801 = vmatpush1.bf16.msra.mxu0 %v610
    %802 = vmatprep.subr.bf16.mxu0 0
    %803 = vmatpush1.bf16.msra.mxu0 %v609
    %804 = vmatprep.subr.bf16.mxu0 0
    %805 = vmatpush1.bf16.msra.mxu0 %v608
    %806 = vmatprep.subr.bf16.mxu0 0
    %807 = vmatpush1.bf16.msra.mxu0 %v607
    %808 = vmatprep.subr.bf16.mxu0 0
    %809 = vmatpush2.bf16.msra.mxu0 %v622
    %810 = vmatprep.subr.bf16.mxu0 0
    %811 = vmatpush2.bf16.msra.mxu0 %v621
    %812 = vmatprep.subr.bf16.mxu0 0
    %813 = vmatpush2.bf16.msra.mxu0 %v620
    %814 = vmatprep.subr.bf16.mxu0 0
    %815 = vmatpush2.bf16.msra.mxu0 %v619
    %816 = vmatprep.subr.bf16.mxu0 0
    %817 = vmatpush2.bf16.msra.mxu0 %v618
    %818 = vmatprep.subr.bf16.mxu0 0
    %819 = vmatpush2.bf16.msra.mxu0 %v617
    %820 = vmatprep.subr.bf16.mxu0 0
    %821 = vmatpush2.bf16.msra.mxu0 %v616
    %822 = vmatprep.subr.bf16.mxu0 0
    %823 = vmatpush2.bf16.msra.mxu0 %v615
    %824 = vmatprep.mubr.bf16.mxu0 %v254
    %825 = vmatmul.mubr.bf16.gmra.mxu0 %v253
    %v826 = vpop.f32.mrf.mxu0
    %v827 = vadd.f32 %v786, %v826
    %v828 = vpop.f32.mrf.mxu0
    %v829 = vpop.f32.mrf.mxu0
    %v830 = vadd.f32 %v789, %v829
    %v831 = vpop.f32.mrf.mxu0
    %832 = vdwg.mxu0
    %833 = vmatprep.subr.bf16.mxu0 0
    %834 = vmatpush1.bf16.msra.mxu0 %v630
    %835 = vmatprep.subr.bf16.mxu0 0
    %836 = vmatpush1.bf16.msra.mxu0 %v629
    %837 = vmatprep.subr.bf16.mxu0 0
    %838 = vmatpush1.bf16.msra.mxu0 %v628
    %839 = vmatprep.subr.bf16.mxu0 0
    %840 = vmatpush1.bf16.msra.mxu0 %v627
    %841 = vmatprep.subr.bf16.mxu0 0
    %842 = vmatpush1.bf16.msra.mxu0 %v626
    %843 = vmatprep.subr.bf16.mxu0 0
    %844 = vmatpush1.bf16.msra.mxu0 %v625
    %845 = vmatprep.subr.bf16.mxu0 0
    %846 = vmatpush1.bf16.msra.mxu0 %v624
    %847 = vmatprep.subr.bf16.mxu0 0
    %848 = vmatpush1.bf16.msra.mxu0 %v623
    %849 = vmatprep.subr.bf16.mxu0 0
    %850 = vmatpush2.bf16.msra.mxu0 %v638
    %851 = vmatprep.subr.bf16.mxu0 0
    %852 = vmatpush2.bf16.msra.mxu0 %v637
    %853 = vmatprep.subr.bf16.mxu0 0
    %854 = vmatpush2.bf16.msra.mxu0 %v636
    %855 = vmatprep.subr.bf16.mxu0 0
    %856 = vmatpush2.bf16.msra.mxu0 %v635
    %857 = vmatprep.subr.bf16.mxu0 0
    %858 = vmatpush2.bf16.msra.mxu0 %v634
    %859 = vmatprep.subr.bf16.mxu0 0
    %860 = vmatpush2.bf16.msra.mxu0 %v633
    %861 = vmatprep.subr.bf16.mxu0 0
    %862 = vmatpush2.bf16.msra.mxu0 %v632
    %863 = vmatprep.subr.bf16.mxu0 0
    %864 = vmatpush2.bf16.msra.mxu0 %v631
    %865 = vmatprep.mubr.bf16.mxu0 %v256
    %866 = vmatmul.mubr.bf16.gmra.mxu0 %v255
    %v867 = vpop.f32.mrf.mxu0
    %v868 = vadd.f32 %v827, %v867
    %v869 = vpop.f32.mrf.mxu0
    %v870 = vpop.f32.mrf.mxu0
    %v871 = vadd.f32 %v830, %v870
    %v872 = vpop.f32.mrf.mxu0
    %873 = vdwg.mxu0
    %874 = vmatprep.subr.bf16.mxu0 0
    %875 = vmatpush1.bf16.msra.mxu0 %v646
    %876 = vmatprep.subr.bf16.mxu0 0
    %877 = vmatpush1.bf16.msra.mxu0 %v645
    %878 = vmatprep.subr.bf16.mxu0 0
    %879 = vmatpush1.bf16.msra.mxu0 %v644
    %880 = vmatprep.subr.bf16.mxu0 0
    %881 = vmatpush1.bf16.msra.mxu0 %v643
    %882 = vmatprep.subr.bf16.mxu0 0
    %883 = vmatpush1.bf16.msra.mxu0 %v642
    %884 = vmatprep.subr.bf16.mxu0 0
    %885 = vmatpush1.bf16.msra.mxu0 %v641
    %886 = vmatprep.subr.bf16.mxu0 0
    %887 = vmatpush1.bf16.msra.mxu0 %v640
    %888 = vmatprep.subr.bf16.mxu0 0
    %889 = vmatpush1.bf16.msra.mxu0 %v639
    %890 = vmatprep.subr.bf16.mxu0 0
    %891 = vmatpush2.bf16.msra.mxu0 %v654
    %892 = vmatprep.subr.bf16.mxu0 0
    %893 = vmatpush2.bf16.msra.mxu0 %v653
    %894 = vmatprep.subr.bf16.mxu0 0
    %895 = vmatpush2.bf16.msra.mxu0 %v652
    %896 = vmatprep.subr.bf16.mxu0 0
    %897 = vmatpush2.bf16.msra.mxu0 %v651
    %898 = vmatprep.subr.bf16.mxu0 0
    %899 = vmatpush2.bf16.msra.mxu0 %v650
    %900 = vmatprep.subr.bf16.mxu0 0
    %901 = vmatpush2.bf16.msra.mxu0 %v649
    %902 = vmatprep.subr.bf16.mxu0 0
    %903 = vmatpush2.bf16.msra.mxu0 %v648
    %904 = vmatprep.subr.bf16.mxu0 0
    %905 = vmatpush2.bf16.msra.mxu0 %v647
    %906 = vmatprep.mubr.bf16.mxu0 %v258
    %907 = vmatmul.mubr.bf16.gmra.mxu0 %v257
    %v908 = vpop.f32.mrf.mxu0
    %v909 = vadd.f32 %v868, %v908
    %v910 = vpop.f32.mrf.mxu0
    %v911 = vpop.f32.mrf.mxu0
    %v912 = vadd.f32 %v871, %v911
    %v913 = vpop.f32.mrf.mxu0
    %914 = vdwg.mxu0
    %915 = vmatprep.subr.bf16.mxu0 0
    %916 = vmatpush1.bf16.msra.mxu0 %v662
    %917 = vmatprep.subr.bf16.mxu0 0
    %918 = vmatpush1.bf16.msra.mxu0 %v661
    %919 = vmatprep.subr.bf16.mxu0 0
    %920 = vmatpush1.bf16.msra.mxu0 %v660
    %921 = vmatprep.subr.bf16.mxu0 0
    %922 = vmatpush1.bf16.msra.mxu0 %v659
    %923 = vmatprep.subr.bf16.mxu0 0
    %924 = vmatpush1.bf16.msra.mxu0 %v658
    %925 = vmatprep.subr.bf16.mxu0 0
    %926 = vmatpush1.bf16.msra.mxu0 %v657
    %927 = vmatprep.subr.bf16.mxu0 0
    %928 = vmatpush1.bf16.msra.mxu0 %v656
    %929 = vmatprep.subr.bf16.mxu0 0
    %930 = vmatpush1.bf16.msra.mxu0 %v655
    %931 = vmatprep.subr.bf16.mxu0 0
    %932 = vmatpush2.bf16.msra.mxu0 %v670
    %933 = vmatprep.subr.bf16.mxu0 0
    %934 = vmatpush2.bf16.msra.mxu0 %v669
    %935 = vmatprep.subr.bf16.mxu0 0
    %936 = vmatpush2.bf16.msra.mxu0 %v668
    %937 = vmatprep.subr.bf16.mxu0 0
    %938 = vmatpush2.bf16.msra.mxu0 %v667
    %939 = vmatprep.subr.bf16.mxu0 0
    %940 = vmatpush2.bf16.msra.mxu0 %v666
    %941 = vmatprep.subr.bf16.mxu0 0
    %942 = vmatpush2.bf16.msra.mxu0 %v665
    %943 = vmatprep.subr.bf16.mxu0 0
    %944 = vmatpush2.bf16.msra.mxu0 %v664
    %945 = vmatprep.subr.bf16.mxu0 0
    %946 = vmatpush2.bf16.msra.mxu0 %v663
    %947 = vmatprep.mubr.bf16.mxu0 %v260
    %948 = vmatmul.mubr.bf16.gmra.mxu0 %v259
    %v949 = vpop.f32.mrf.mxu0
    %v950 = vadd.f32 %v909, %v949
    %v951 = vpop.f32.mrf.mxu0
    %v952 = vpop.f32.mrf.mxu0
    %v953 = vadd.f32 %v912, %v952
    %v954 = vpop.f32.mrf.mxu0
    %955 = vdwg.mxu0
    %v956 = vmul.f32 %v950, %v950
    %v957 = vmul.f32 %v953, %v953
    %958 = vadd.xlane.f32.xlu0 %v956
    %v959 = vpop.xlane.xlu0 %958
    %960 = vadd.xlane.f32.xlu0 %v957
    %v961 = vpop.xlane.xlu0 %960
    %v962 = vmax.f32 %v959, 1e-24
    %v963 = vmax.f32 %v961, 1e-24
    %v964 = vrsqrt.pop %v962
    %v965 = vrsqrt.pop %v963
    %v966 = vmul.f32 %v950, %v964
    %v967 = vmul.f32 %v953, %v965
    %968 = vst [vmem:[#allocation7] sm:$0xff] %v966
    %969 = vst [vmem:[#allocation7 + $0x8] sm:$0xff] %v967
    // Predicated region
    $region22: #{tpu_custom_call.1} parent=1 // pred_check
      _
    $region23: #{tpu_custom_call.1} parent=1 // pred_check_branch
      %971 = sbr.rel (0) target = $region25
    $region24: #{tpu_custom_call.1} parent=1 // pred_region
      %s973 = ssub.s32 256, 256
      %974 = vsyncadd [#allocation4], %s973
      %s975 = sshll.u32 [#allocation7], 4
      %s976 = int_to_ptr.vmem [resolvable:$true] %s975
      %981 = dma.vmem_to_hbm [thread:$0]  %s976, 256, %s3, [#allocation4], 128, 128, 8
    $region25: #{tpu_custom_call.1} parent=1 // pred_fallthru
      _
    // Predicated region
    $region26: #{tpu_custom_call.1} parent=1 // pred_check
      _
    $region27: #{tpu_custom_call.1} parent=1 // pred_check_branch
      %983 = sbr.rel (0) target = $region29
    $region28: #{tpu_custom_call.1} parent=1 // pred_region
      %984 = dma.done [#allocation4], 256
    $region29: #{tpu_custom_call.1} parent=1 // pred_fallthru
      _
    %985 = vsyncpa [#allocation3], 1
    %986 = vsyncpa [#allocation6], 1
    %987 = vsyncpa [#allocation4], 1

</llo_original>
